<compile_context>
chip_gen: v7x
topology: tpu7x:2x2x1
jax: 0.10.0
libtpu: 0.0.40
codegen_flags: <defaults>
</compile_context>

<pallas_src>
import functools
import math

import jax
import jax.numpy as jnp
from jax import lax
from jax.experimental import pallas as pl
from jax.experimental.pallas import tpu as pltpu

_LANE = 128
_MAX_BLOCK_R = 256        # row-tile cap: bounds accumulators / VMEM independent of N
_MAX_BLOCK_D = 131072     # lane-tile cap (old 32768 cap removed per review)


def _dice_kernel(x_ref, t_ref, o_ref, inter_acc, denom_acc, total_acc,
                 *, n, fold, r_total, d_valid, block_r, block_d):
    r = pl.program_id(0)
    d = pl.program_id(1)
    last_r = pl.num_programs(0) - 1
    last_d = pl.num_programs(1) - 1

    # running dice-sum init once; per-row-block accumulators init on each d == 0
    @pl.when(jnp.logical_and(r == 0, d == 0))
    def _():
        total_acc[...] = jnp.zeros_like(total_acc)

    @pl.when(d == 0)
    def _():
        inter_acc[...] = jnp.zeros_like(inter_acc)
        denom_acc[...] = jnp.zeros_like(denom_acc)

    # Fused reduction over this tile: per 128-lane chunk cast+mul+add, partials kept
    # in vregs, a single VMEM "+=" at the end.  No full-tile f32 temporaries.
    def accumulate(masked):
        nfull = block_d // _LANE
        rem = block_d % _LANE
        limit = d_valid - d * block_d     # valid columns in this d-block (traced)

        def load_chunk(off):
            xc = x_ref[:, pl.ds(off, _LANE)].astype(jnp.float32)
            tc = t_ref[:, pl.ds(off, _LANE)].astype(jnp.float32)
            if masked:
                lane = lax.broadcasted_iota(jnp.int32, (block_r, _LANE), 1) + off
                keep = lane < limit
                xc = jnp.where(keep, xc, 0.0)
                tc = jnp.where(keep, tc, 0.0)
            return xc, tc

        if nfull > 0:
            zero = jnp.zeros((block_r, _LANE), jnp.float32)
            if nfull <= 16:
                pi, ps = zero, zero
                for k in range(nfull):                  # short: full static unroll
                    xc, tc = load_chunk(k * _LANE)
                    pi = pi + xc * tc
                    ps = ps + xc + tc
            else:
                def body(k, carry):
                    pi, ps = carry
                    xc, tc = load_chunk(pl.multiple_of(k * _LANE, _LANE))
                    return pi + xc * tc, ps + xc + tc
                pi, ps = lax.fori_loop(0, nfull, body, (zero, zero), unroll=4)
            inter_acc[...] += pi
            denom_acc[...] += ps
        if rem > 0:
            # Only reachable when block_d equals the full row length (single, exact
            # block), so no masking is needed for this sub-128 tail.
            xs = x_ref[:, nfull * _LANE:block_d].astype(jnp.float32)
            ts = t_ref[:, nfull * _LANE:block_d].astype(jnp.float32)
            inter_acc[:, 0:1] += jnp.sum(xs * ts, axis=1, keepdims=True)
            denom_acc[:, 0:1] += jnp.sum(xs + ts, axis=1, keepdims=True)

    if d_valid % block_d != 0:
        # A partial last D-tile exists: mask only on that step; interior steps are
        # unmasked (no per-element iota/compare/select on the hot path).
        @pl.when(d < last_d)
        def _():
            accumulate(masked=False)

        @pl.when(d == last_d)
        def _():
            accumulate(masked=True)
    else:
        accumulate(masked=False)

    # Finalize this row block on the last D step: one lane reduce, per-sample dice,
    # fold into the running (1,1) total; emit the scalar loss on the final step.
    @pl.when(d == last_d)
    def _():
        smooth = jnp.float32(1.0)
        inter = inter_acc[...]
        denom = denom_acc[...]
        if fold == 1:
            inter_s = jnp.sum(inter, axis=1, keepdims=True)    # (block_r, 1)
            denom_s = jnp.sum(denom, axis=1, keepdims=True)
            per = 2.0 * (inter_s + smooth) / (denom_s + smooth)
            if r_total % block_r != 0:
                row = lax.broadcasted_iota(jnp.int32, per.shape, 0) + r * block_r
                per = jnp.where(row < r_total, per, 0.0)       # drop padded rows
            block_sum = jnp.sum(per, axis=0, keepdims=True)    # (1, 1)
        else:
            # fold > 1 only when N < 8 (single row block): static loop over samples,
            # each sample owns `fold` consecutive rows of the accumulators.
            block_sum = jnp.zeros((1, 1), jnp.float32)
            for i in range(n):
                gi = jnp.sum(inter[i * fold:(i + 1) * fold, :], keepdims=True)
                gd = jnp.sum(denom[i * fold:(i + 1) * fold, :], keepdims=True)
                block_sum = block_sum + 2.0 * (gi + smooth) / (gd + smooth)
        new_total = total_acc[...] + block_sum
        total_acc[...] = new_total

        @pl.when(r == last_r)
        def _():
            o_ref[...] = 1.0 - new_total / jnp.float32(n)


def _vmem_plan():
    """Generation-aware (pipeline budget, scoped limit) in bytes."""
    try:
        cap = int(pltpu.get_tpu_info().vmem_capacity_bytes)
    except Exception:
        cap = 64 * 1024 * 1024
    if cap >= 96 * 1024 * 1024:                    # v5e / v6e: 128 MiB physical
        return 40 * 1024 * 1024, 96 * 1024 * 1024
    return 16 * 1024 * 1024, 40 * 1024 * 1024      # v7x (64 MiB) or unknown


def dice_loss(inp, target):
    """Pallas DiceLoss; matches the PyTorch module's forward(). Returns a scalar."""
    N = target.shape[0]
    D = math.prod(inp.shape[1:]) if inp.ndim > 1 else 1

    # Sublane fold: densify (8,128) vregs / HBM tiles when the batch is tiny.
    fold = 1
    if N < 8:
        for cand in (8, 4, 2):
            if D % cand == 0:
                fold = cand
                break
    R = N * fold
    Dr = D // fold

    # Native dtype (no wrapper cast/pad); row-major reshape keeps sample i's data in
    # the contiguous row group [i*fold, (i+1)*fold).
    x = inp.reshape(R, Dr)
    t = target.reshape(R, Dr)

    # Row tiling bounds VMEM / accumulator footprint independent of N.
    block_r = R if R <= _MAX_BLOCK_R else _MAX_BLOCK_R        # R, or a multiple of 8
    grid_r = pl.cdiv(R, block_r)

    # Widest lane block that fits the double-buffered budget.
    budget, limit = _vmem_plan()
    itemsize = max(jnp.dtype(x.dtype).itemsize, jnp.dtype(t.dtype).itemsize)
    acc_bytes = 2 * block_r * _LANE * 4 + 4096                # accumulators + total
    per_col = 2 * 2 * block_r * itemsize                      # 2 inputs x 2 buffers
    max_tile = max(((budget - acc_bytes) // per_col) // _LANE * _LANE, _LANE)
    max_tile = min(max_tile, _MAX_BLOCK_D)
    block_d = Dr if Dr <= max_tile else max_tile              # full-extent or x128
    grid_d = pl.cdiv(Dr, block_d)

    # Avoid the degenerate no-overlap single-step grid for multi-MiB inputs: give the
    # pipeline >= ~4 steps so DMA and VPU work overlap.
    total_bytes = 2 * R * Dr * itemsize
    if grid_r * grid_d == 1 and total_bytes > (4 << 20) and Dr >= 4 * _LANE:
        block_d = min(max_tile, pl.cdiv(pl.cdiv(Dr, 4), _LANE) * _LANE)
        grid_d = pl.cdiv(Dr, block_d)

    kernel = functools.partial(
        _dice_kernel, n=N, fold=fold, r_total=R, d_valid=Dr,
        block_r=block_r, block_d=block_d)

    out = pl.pallas_call(
        kernel,
        out_shape=jax.ShapeDtypeStruct((1, 1), jnp.float32),
        grid_spec=pltpu.PrefetchScalarGridSpec(
            num_scalar_prefetch=0,
            grid=(grid_r, grid_d),
            in_specs=[
                pl.BlockSpec((block_r, block_d), lambda r, d: (r, d)),
                pl.BlockSpec((block_r, block_d), lambda r, d: (r, d)),
            ],
            out_specs=pl.BlockSpec((1, 1), lambda r, d: (0, 0)),
            scratch_shapes=[
                pltpu.VMEM((block_r, _LANE), jnp.float32),   # intersection partials
                pltpu.VMEM((block_r, _LANE), jnp.float32),   # denominator partials
                pltpu.VMEM((1, 1), jnp.float32),             # running dice-sum
            ],
        ),
        compiler_params=pltpu.CompilerParams(
            dimension_semantics=("arbitrary", "arbitrary"),
            vmem_limit_bytes=limit,
        ),
    )(x, t)
    return out[0, 0]


def dice_loss_ref(inp, target):
    N = target.shape[0]
    x = inp.reshape(N, -1).astype(jnp.float32)
    t = target.reshape(N, -1).astype(jnp.float32)
    smooth = 1.0
    inter = jnp.sum(x * t, axis=1)
    per = 2.0 * (inter + smooth) / (jnp.sum(x, axis=1) + jnp.sum(t, axis=1) + smooth)
    return 1.0 - jnp.sum(per) / N


if __name__ == "__main__":
    key = jax.random.PRNGKey(0)
    k1, k2 = jax.random.split(key)
    # NCHW, small shapes: batch=2, channels=4, spatial=16x16
    x = jax.nn.sigmoid(jax.random.normal(k1, (2, 4, 16, 16), dtype=jnp.float32))
    y = (jax.random.uniform(k2, (2, 4, 16, 16)) > 0.5).astype(jnp.float32)

    loss = dice_loss(x, y)
    jax.block_until_ready(loss)

    ref = dice_loss_ref(x, y)
    assert jnp.allclose(loss, ref, rtol=1e-5, atol=1e-5), (loss, ref)
    print("KERNEL_OK")
</pallas_src>

<mosaic_0001>
module attributes {stable_mosaic.version = 11 : i64} {
  func.func @_dice_kernel(%arg0: i32, %arg1: i32, %arg2: memref<16x128xf32, #tpu.memory_space<vmem>>, %arg3: memref<16x128xf32, #tpu.memory_space<vmem>>, %arg4: memref<1x1xf32, #tpu.memory_space<vmem>>, %arg5: memref<16x128xf32, #tpu.memory_space<vmem>>, %arg6: memref<16x128xf32, #tpu.memory_space<vmem>>, %arg7: memref<1x1xf32, #tpu.memory_space<vmem>>) attributes {dimension_semantics = [#tpu.dimension_semantics<arbitrary>, #tpu.dimension_semantics<arbitrary>], iteration_bounds = array<i64: 1, 1>, scalar_prefetch = 0 : i64, scratch_operands = 3 : i64, tpu.core_type = #tpu.core_type<tc>, window_params = [{transform_indices = @transform_0, window_bounds = array<i64: 16, 128>}, {transform_indices = @transform_1, window_bounds = array<i64: 16, 128>}, {pipeline_mode = #tpu.pipeline_mode<synchronous>, transform_indices = @transform_2, window_bounds = array<i64: 1, 1>}]} {
    %c0_i32 = arith.constant 0 : i32
    %0 = arith.cmpi eq, %arg0, %c0_i32 : i32
    %c0_i32_0 = arith.constant 0 : i32
    %1 = arith.cmpi eq, %arg1, %c0_i32_0 : i32
    %2 = arith.andi %0, %1 : i1
    %3 = arith.extui %2 : i1 to i32
    %c0_i32_1 = arith.constant 0 : i32
    %4 = arith.cmpi ne, %3, %c0_i32_1 : i32
    scf.if %4 {
      %cst_17 = arith.constant 0.000000e+00 : f32
      %24 = vector.broadcast %cst_17 : f32 to vector<1x1xf32>
      %c0_18 = arith.constant 0 : index
      %c0_19 = arith.constant 0 : index
      %25 = vector.load %arg7[%c0_18, %c0_19] : memref<1x1xf32, #tpu.memory_space<vmem>>, vector<1x1xf32>
      tpu.vector_store %arg7[%c0_18, %c0_19], %24 {strides = array<i32>} : memref<1x1xf32, #tpu.memory_space<vmem>>, vector<1x1xf32>,
    } else {
    }
    %c0_i32_2 = arith.constant 0 : i32
    %5 = arith.cmpi eq, %arg1, %c0_i32_2 : i32
    %6 = arith.extui %5 : i1 to i32
    %c0_i32_3 = arith.constant 0 : i32
    %7 = arith.cmpi ne, %6, %c0_i32_3 : i32
    scf.if %7 {
      %cst_17 = arith.constant 0.000000e+00 : f32
      %24 = vector.broadcast %cst_17 : f32 to vector<16x128xf32>
      %c0_18 = arith.constant 0 : index
      %c0_19 = arith.constant 0 : index
      %25 = vector.load %arg5[%c0_18, %c0_19] : memref<16x128xf32, #tpu.memory_space<vmem>>, vector<16x128xf32>
      tpu.vector_store %arg5[%c0_18, %c0_19], %24 {strides = array<i32>} : memref<16x128xf32, #tpu.memory_space<vmem>>, vector<16x128xf32>,
      %cst_20 = arith.constant 0.000000e+00 : f32
      %26 = vector.broadcast %cst_20 : f32 to vector<16x128xf32>
      %c0_21 = arith.constant 0 : index
      %c0_22 = arith.constant 0 : index
      %27 = vector.load %arg6[%c0_21, %c0_22] : memref<16x128xf32, #tpu.memory_space<vmem>>, vector<16x128xf32>
      tpu.vector_store %arg6[%c0_21, %c0_22], %26 {strides = array<i32>} : memref<16x128xf32, #tpu.memory_space<vmem>>, vector<16x128xf32>,
    } else {
    }
    %cst = arith.constant 0.000000e+00 : f32
    %8 = vector.broadcast %cst : f32 to vector<16x128xf32>
    %c0 = arith.constant 0 : index
    %c0_4 = arith.constant 0 : index
    %9 = vector.load %arg2[%c0, %c0_4] : memref<16x128xf32, #tpu.memory_space<vmem>>, vector<16x128xf32>
    %c0_5 = arith.constant 0 : index
    %c0_6 = arith.constant 0 : index
    %10 = vector.load %arg3[%c0_5, %c0_6] : memref<16x128xf32, #tpu.memory_space<vmem>>, vector<16x128xf32>
    %11 = arith.mulf %9, %10 : vector<16x128xf32>
    %12 = arith.addf %8, %11 : vector<16x128xf32>
    %13 = arith.addf %8, %9 : vector<16x128xf32>
    %14 = arith.addf %13, %10 : vector<16x128xf32>
    %c0_7 = arith.constant 0 : index
    %c0_8 = arith.constant 0 : index
    %15 = vector.load %arg5[%c0_7, %c0_8] : memref<16x128xf32, #tpu.memory_space<vmem>>, vector<16x128xf32>
    %16 = arith.addf %15, %12 : vector<16x128xf32>
    %c0_9 = arith.constant 0 : index
    %c0_10 = arith.constant 0 : index
    %17 = vector.load %arg5[%c0_9, %c0_10] : memref<16x128xf32, #tpu.memory_space<vmem>>, vector<16x128xf32>
    tpu.vector_store %arg5[%c0_9, %c0_10], %16 {strides = array<i32>} : memref<16x128xf32, #tpu.memory_space<vmem>>, vector<16x128xf32>,
    %c0_11 = arith.constant 0 : index
    %c0_12 = arith.constant 0 : index
    %18 = vector.load %arg6[%c0_11, %c0_12] : memref<16x128xf32, #tpu.memory_space<vmem>>, vector<16x128xf32>
    %19 = arith.addf %18, %14 : vector<16x128xf32>
    %c0_13 = arith.constant 0 : index
    %c0_14 = arith.constant 0 : index
    %20 = vector.load %arg6[%c0_13, %c0_14] : memref<16x128xf32, #tpu.memory_space<vmem>>, vector<16x128xf32>
    tpu.vector_store %arg6[%c0_13, %c0_14], %19 {strides = array<i32>} : memref<16x128xf32, #tpu.memory_space<vmem>>, vector<16x128xf32>,
    %c0_i32_15 = arith.constant 0 : i32
    %21 = arith.cmpi eq, %arg1, %c0_i32_15 : i32
    %22 = arith.extui %21 : i1 to i32
    %c0_i32_16 = arith.constant 0 : i32
    %23 = arith.cmpi ne, %22, %c0_i32_16 : i32
    scf.if %23 {
      %c0_17 = arith.constant 0 : index
      %c0_18 = arith.constant 0 : index
      %24 = vector.load %arg5[%c0_17, %c0_18] : memref<16x128xf32, #tpu.memory_space<vmem>>, vector<16x128xf32>
      %c0_19 = arith.constant 0 : index
      %c0_20 = arith.constant 0 : index
      %25 = vector.load %arg6[%c0_19, %c0_20] : memref<16x128xf32, #tpu.memory_space<vmem>>, vector<16x128xf32>
      %cst_21 = arith.constant 0.000000e+00 : f32
      %26 = vector.broadcast %cst_21 : f32 to vector<1x1xf32>
      %27 = vector.extract_strided_slice %24 {offsets = [0, 0], sizes = [8, 128], strides = [1, 1]} : vector<16x128xf32> to vector<8x128xf32>
      %28 = vector.shape_cast %27 : vector<8x128xf32> to vector<1x8x128xf32>
      %cst_22 = arith.constant dense<0.000000e+00> : vector<1xf32>
      %29 = vector.multi_reduction <add>, %28, %cst_22 [1, 2] : vector<1x8x128xf32> to vector<1xf32>
      %30 = vector.shape_cast %29 : vector<1xf32> to vector<1x1x1xf32>
      %31 = vector.extract %30[0, 0, 0] : f32 from vector<1x1x1xf32>
      %32 = vector.broadcast %31 : f32 to vector<1x1xf32>
      %33 = vector.extract_strided_slice %25 {offsets = [0, 0], sizes = [8, 128], strides = [1, 1]} : vector<16x128xf32> to vector<8x128xf32>
      %34 = vector.shape_cast %33 : vector<8x128xf32> to vector<1x8x128xf32>
      %cst_23 = arith.constant dense<0.000000e+00> : vector<1xf32>
      %35 = vector.multi_reduction <add>, %34, %cst_23 [1, 2] : vector<1x8x128xf32> to vector<1xf32>
      %36 = vector.shape_cast %35 : vector<1xf32> to vector<1x1x1xf32>
      %37 = vector.extract %36[0, 0, 0] : f32 from vector<1x1x1xf32>
      %38 = vector.broadcast %37 : f32 to vector<1x1xf32>
      %cst_24 = arith.constant 1.000000e+00 : f32
      %39 = vector.broadcast %cst_24 : f32 to vector<1x1xf32>
      %40 = arith.addf %32, %39 : vector<1x1xf32>
      %cst_25 = arith.constant 2.000000e+00 : f32
      %41 = vector.broadcast %cst_25 : f32 to vector<1x1xf32>
      %42 = arith.mulf %41, %40 : vector<1x1xf32>
      %cst_26 = arith.constant 1.000000e+00 : f32
      %43 = vector.broadcast %cst_26 : f32 to vector<1x1xf32>
      %44 = arith.addf %38, %43 : vector<1x1xf32>
      %45 = arith.divf %42, %44 : vector<1x1xf32>
      %46 = arith.addf %26, %45 : vector<1x1xf32>
      %47 = vector.extract_strided_slice %24 {offsets = [8, 0], sizes = [8, 128], strides = [1, 1]} : vector<16x128xf32> to vector<8x128xf32>
      %48 = vector.shape_cast %47 : vector<8x128xf32> to vector<1x8x128xf32>
      %cst_27 = arith.constant dense<0.000000e+00> : vector<1xf32>
      %49 = vector.multi_reduction <add>, %48, %cst_27 [1, 2] : vector<1x8x128xf32> to vector<1xf32>
      %50 = vector.shape_cast %49 : vector<1xf32> to vector<1x1x1xf32>
      %51 = vector.extract %50[0, 0, 0] : f32 from vector<1x1x1xf32>
      %52 = vector.broadcast %51 : f32 to vector<1x1xf32>
      %53 = vector.extract_strided_slice %25 {offsets = [8, 0], sizes = [8, 128], strides = [1, 1]} : vector<16x128xf32> to vector<8x128xf32>
      %54 = vector.shape_cast %53 : vector<8x128xf32> to vector<1x8x128xf32>
      %cst_28 = arith.constant dense<0.000000e+00> : vector<1xf32>
      %55 = vector.multi_reduction <add>, %54, %cst_28 [1, 2] : vector<1x8x128xf32> to vector<1xf32>
      %56 = vector.shape_cast %55 : vector<1xf32> to vector<1x1x1xf32>
      %57 = vector.extract %56[0, 0, 0] : f32 from vector<1x1x1xf32>
      %58 = vector.broadcast %57 : f32 to vector<1x1xf32>
      %cst_29 = arith.constant 1.000000e+00 : f32
      %59 = vector.broadcast %cst_29 : f32 to vector<1x1xf32>
      %60 = arith.addf %52, %59 : vector<1x1xf32>
      %cst_30 = arith.constant 2.000000e+00 : f32
      %61 = vector.broadcast %cst_30 : f32 to vector<1x1xf32>
      %62 = arith.mulf %61, %60 : vector<1x1xf32>
      %cst_31 = arith.constant 1.000000e+00 : f32
      %63 = vector.broadcast %cst_31 : f32 to vector<1x1xf32>
      %64 = arith.addf %58, %63 : vector<1x1xf32>
      %65 = arith.divf %62, %64 : vector<1x1xf32>
      %66 = arith.addf %46, %65 : vector<1x1xf32>
      %c0_32 = arith.constant 0 : index
      %c0_33 = arith.constant 0 : index
      %67 = vector.load %arg7[%c0_32, %c0_33] : memref<1x1xf32, #tpu.memory_space<vmem>>, vector<1x1xf32>
      %68 = arith.addf %67, %66 : vector<1x1xf32>
      %c0_34 = arith.constant 0 : index
      %c0_35 = arith.constant 0 : index
      %69 = vector.load %arg7[%c0_34, %c0_35] : memref<1x1xf32, #tpu.memory_space<vmem>>, vector<1x1xf32>
      tpu.vector_store %arg7[%c0_34, %c0_35], %68 {strides = array<i32>} : memref<1x1xf32, #tpu.memory_space<vmem>>, vector<1x1xf32>,
      %c0_i32_36 = arith.constant 0 : i32
      %70 = arith.cmpi eq, %arg0, %c0_i32_36 : i32
      %71 = arith.extui %70 : i1 to i32
      %c0_i32_37 = arith.constant 0 : i32
      %72 = arith.cmpi ne, %71, %c0_i32_37 : i32
      scf.if %72 {
        %cst_38 = arith.constant 2.000000e+00 : f32
        %73 = vector.broadcast %cst_38 : f32 to vector<1x1xf32>
        %74 = arith.divf %68, %73 : vector<1x1xf32>
        %cst_39 = arith.constant 1.000000e+00 : f32
        %75 = vector.broadcast %cst_39 : f32 to vector<1x1xf32>
        %76 = arith.subf %75, %74 : vector<1x1xf32>
        %c0_40 = arith.constant 0 : index
        %c0_41 = arith.constant 0 : index
        %77 = vector.load %arg4[%c0_40, %c0_41] : memref<1x1xf32, #tpu.memory_space<vmem>>, vector<1x1xf32>
        tpu.vector_store %arg4[%c0_40, %c0_41], %76 {strides = array<i32>} : memref<1x1xf32, #tpu.memory_space<vmem>>, vector<1x1xf32>,
      } else {
      }
    } else {
    }
    return
  }
  func.func @transform_0(%arg0: i32, %arg1: i32) -> (i32, i32) {
    %c0_i32 = arith.constant 0 : i32
    return %arg0, %arg1 : i32, i32
  }
  func.func @transform_1(%arg0: i32, %arg1: i32) -> (i32, i32) {
    %c0_i32 = arith.constant 0 : i32
    return %arg0, %arg1 : i32, i32
  }
  func.func @transform_2(%arg0: i32, %arg1: i32) -> (i32, i32) {
    %c0_i32 = arith.constant 0 : i32
    %c0_i32_0 = arith.constant 0 : i32
    %c0_i32_1 = arith.constant 0 : i32
    return %c0_i32, %c0_i32_0 : i32, i32
  }
}

</mosaic_0001>

<llo_original>
// kernel: tpu_custom_call.1
$region0: #{tpu_custom_call.1}
  #allocation0 [shape = 'u32[]', space=smem, size = 0x4, offset = 0x4, fixed_abs, tag = 'smem constant byte address 0x4 - core index']
  #allocation1 [shape = 'u32[144,128]{1,0:T(1,128)}', space=vmem, size = 0x12000, scoped, tag = 'internal scratch']
  #allocation2 [shape = 'f32[16,128]{1,0:T(8,128)}', space=vmem, size = 0x2000, scoped, tag = 'scratch operand']
  #allocation3 [shape = 'f32[16,128]{1,0:T(8,128)}', space=vmem, size = 0x2000, scoped, tag = 'scratch operand']
  #allocation4 [shape = 'f32[1,1]{1,0:T(1,128)}', space=vmem, size = 0x200, scoped, tag = 'scratch operand']
  %s0 = inlined_call_operand.hbm [shape: f32[16,128], index: 0, kind: input, shape index: {}]
  %s1 = inlined_call_operand.hbm [shape: f32[16,128], index: 1, kind: input, shape index: {}]
  %s2 = inlined_call_operand.hbm [shape: f32[1,1], index: 2, kind: output, shape index: {}]
  %s3 = sld [smem:[#allocation0]]
  $region42: #{tpu_custom_call.1} parent=0
    _
  %s5 = ssub.s32 1, %s3
  %s6 = scalar_select 0, %s5, %s3
  $region1: #{tpu_custom_call.1} parent=0
    #allocation5 [shape = 'u8[8192]{0}', space=vmem, size = 0x2000, scoped, tag = 'input window, operand 0, single buffered']
    #allocation6 [shape = 's32[1]{0}', space=sflag, size = 0x4, scoped, tag = 'scoped memory for tpu_custom_call.1']
    #allocation7 [shape = 's32[1]{0}', space=sflag, size = 0x4, scoped, tag = 'scoped memory for tpu_custom_call.1']
    #allocation8 [shape = 'u8[8192]{0}', space=vmem, size = 0x2000, scoped, tag = 'input window, operand 1, single buffered']
    #allocation9 [shape = 's32[1]{0}', space=sflag, size = 0x4, scoped, tag = 'scoped memory for tpu_custom_call.1']
    #allocation10 [shape = 'u8[512]{0}', space=vmem, size = 0x400, scoped, tag = 'output window, operand 0, single buffered']
    %7 = vsyncpa [#allocation6], 0
    %8 = vsyncpa [#allocation9], 0
    %9 = vsyncpa [#allocation7], 0
    // Predicated region
    $region2: #{tpu_custom_call.1} parent=1 // pred_check
      _
    $region3: #{tpu_custom_call.1} parent=1 // pred_check_branch
      %11 = sbr.rel (0) target = $region5
    $region4: #{tpu_custom_call.1} parent=1 // pred_region
      %s13 = ssub.s32 256, 256
      %14 = vsyncadd [#allocation6], %s13
      %s15 = sshll.u32 [#allocation5], 4
      %s16 = int_to_ptr.vmem [resolvable:$true] %s15
      %21 = dma.hbm_to_vmem [thread:$0]  %s0, 256, %s16, [#allocation6], 128, 128, 8
    $region5: #{tpu_custom_call.1} parent=1 // pred_fallthru
      _
    // Predicated region
    $region6: #{tpu_custom_call.1} parent=1 // pred_check
      _
    $region7: #{tpu_custom_call.1} parent=1 // pred_check_branch
      %23 = sbr.rel (0) target = $region9
    $region8: #{tpu_custom_call.1} parent=1 // pred_region
      %s25 = ssub.s32 256, 256
      %26 = vsyncadd [#allocation9], %s25
      %s27 = sshll.u32 [#allocation8], 4
      %s28 = int_to_ptr.vmem [resolvable:$true] %s27
      %33 = dma.hbm_to_vmem [thread:$0]  %s1, 256, %s28, [#allocation9], 128, 128, 8
    $region9: #{tpu_custom_call.1} parent=1 // pred_fallthru
      _
    // Predicated region
    $region10: #{tpu_custom_call.1} parent=1 // pred_check
      _
    $region11: #{tpu_custom_call.1} parent=1 // pred_check_branch
      %35 = sbr.rel (0) target = $region13
    $region12: #{tpu_custom_call.1} parent=1 // pred_region
      %36 = dma.done [#allocation6], 256
    $region13: #{tpu_custom_call.1} parent=1 // pred_fallthru
      _
    // Predicated region
    $region14: #{tpu_custom_call.1} parent=1 // pred_check
      _
    $region15: #{tpu_custom_call.1} parent=1 // pred_check_branch
      %38 = sbr.rel (0) target = $region17
    $region16: #{tpu_custom_call.1} parent=1 // pred_region
      %39 = dma.done [#allocation9], 256
    $region17: #{tpu_custom_call.1} parent=1 // pred_fallthru
      _
    %p40 = scmp.eq.s32.totalorder 0, 0
    %p41 = scmp.eq.s32.totalorder 0, 0
    %p42 = pnand %p40, %p41
    %p43 = pneg %p42
    // Predicated region
    $region18: #{tpu_custom_call.1} parent=1 // pred_check
      _
    $region19: #{tpu_custom_call.1} parent=1 // pred_check_branch
      %45 = sbr.rel (%p42) target = $region21
    $region20: #{tpu_custom_call.1} parent=1 // pred_region
      %vm46 = vcmask 0
      %47 = vst.msk [vmem:[#allocation4] sm:$0x1] %vm46, 0.0
    $region21: #{tpu_custom_call.1} parent=1 // pred_fallthru
      _
    // Predicated region
    $region22: #{tpu_custom_call.1} parent=1 // pred_check
      %p48 = pneg %p41
    $region23: #{tpu_custom_call.1} parent=1 // pred_check_branch
      %50 = sbr.rel (%p48) target = $region25
    $region24: #{tpu_custom_call.1} parent=1 // pred_region
      %51 = vst [vmem:[#allocation2] sm:$0xff] 0.0
      %52 = vst [vmem:[#allocation2 + $0x8] sm:$0xff] 0.0
      %53 = vst [vmem:[#allocation3] sm:$0xff] 0.0
      %54 = vst [vmem:[#allocation3 + $0x8] sm:$0xff] 0.0
    $region25: #{tpu_custom_call.1} parent=1 // pred_fallthru
      _
    %v55 = vld [vmem:[#allocation5] sm:$0xff]
    %v56 = vld [vmem:[#allocation5 + $0x8] sm:$0xff]
    %v57 = vld [vmem:[#allocation8] sm:$0xff]
    %v58 = vld [vmem:[#allocation8 + $0x8] sm:$0xff]
    %v59 = vmul.f32 %v55, %v57
    %v60 = vmul.f32 %v56, %v58
    %v61 = vadd.f32 %v59, 0.0
    %v62 = vadd.f32 %v60, 0.0
    %v63 = vadd.f32 %v55, 0.0
    %v64 = vadd.f32 %v56, 0.0
    %v65 = vadd.f32 %v63, %v57
    %v66 = vadd.f32 %v64, %v58
    %v67 = vld [vmem:[#allocation2] sm:$0xff]
    %v68 = vld [vmem:[#allocation2 + $0x8] sm:$0xff]
    %v69 = vadd.f32 %v67, %v61
    %v70 = vadd.f32 %v68, %v62
    %71 = vst [vmem:[#allocation2] sm:$0xff] %v69
    %72 = vst [vmem:[#allocation2 + $0x8] sm:$0xff] %v70
    %v73 = vld [vmem:[#allocation3] sm:$0xff]
    %v74 = vld [vmem:[#allocation3 + $0x8] sm:$0xff]
    %v75 = vadd.f32 %v73, %v65
    %v76 = vadd.f32 %v74, %v66
    %77 = vst [vmem:[#allocation3] sm:$0xff] %v75
    %78 = vst [vmem:[#allocation3 + $0x8] sm:$0xff] %v76
    // Predicated region
    $region26: #{tpu_custom_call.1} parent=1 // pred_check
      %p79 = pneg %p41
    $region27: #{tpu_custom_call.1} parent=1 // pred_check_branch
      %81 = sbr.rel (%p79) target = $region29
    $region28: #{tpu_custom_call.1} parent=1 // pred_region
      %v82 = vld [vmem:[#allocation2] sm:$0xff]
      %v83 = vld [vmem:[#allocation2 + $0x8] sm:$0xff]
      %v84 = vld [vmem:[#allocation3] sm:$0xff]
      %v85 = vld [vmem:[#allocation3 + $0x8] sm:$0xff]
      %86 = vadd.xlane.f32.xlu0 %v82
      %v87 = vpop.xlane.xlu0 %86
      %v88 = vrot.slane %v87, 4
      %v89 = vadd.f32 %v87, %v88
      %v90 = vrot.slane %v89, 2
      %v91 = vadd.f32 %v89, %v90
      %v92 = vrot.slane %v91, 1
      %v93 = vadd.f32 %v91, %v92
      %s94 = vtos %v93
      %v95 = vstv %s94
      %96 = vadd.xlane.f32.xlu0 %v84
      %v97 = vpop.xlane.xlu0 %96
      %v98 = vrot.slane %v97, 4
      %v99 = vadd.f32 %v97, %v98
      %v100 = vrot.slane %v99, 2
      %v101 = vadd.f32 %v99, %v100
      %v102 = vrot.slane %v101, 1
      %v103 = vadd.f32 %v101, %v102
      %s104 = vtos %v103
      %v105 = vstv %s104
      %v106 = vadd.f32 %v95, 1.0
      %v107 = vmul.f32 %v106, 2.0
      %v108 = vadd.f32 %v105, 1.0
      %v109 = vrcp.pop %v108
      %v110 = vmul.f32 %v107, %v109
      %v111 = vadd.f32 %v110, 0.0
      %112 = vadd.xlane.f32.xlu0 %v83
      %v113 = vpop.xlane.xlu0 %112
      %v114 = vrot.slane %v113, 4
      %v115 = vadd.f32 %v113, %v114
      %v116 = vrot.slane %v115, 2
      %v117 = vadd.f32 %v115, %v116
      %v118 = vrot.slane %v117, 1
      %v119 = vadd.f32 %v117, %v118
      %s120 = vtos %v119
      %v121 = vstv %s120
      %122 = vadd.xlane.f32.xlu0 %v85
      %v123 = vpop.xlane.xlu0 %122
      %v124 = vrot.slane %v123, 4
      %v125 = vadd.f32 %v123, %v124
      %v126 = vrot.slane %v125, 2
      %v127 = vadd.f32 %v125, %v126
      %v128 = vrot.slane %v127, 1
      %v129 = vadd.f32 %v127, %v128
      %s130 = vtos %v129
      %v131 = vstv %s130
      %v132 = vadd.f32 %v121, 1.0
      %v133 = vmul.f32 %v132, 2.0
      %v134 = vadd.f32 %v131, 1.0
      %v135 = vrcp.pop %v134
      %v136 = vmul.f32 %v133, %v135
      %v137 = vadd.f32 %v111, %v136
      %v138 = vld [vmem:[#allocation4] sm:$0x1]
      %v139 = vadd.f32 %v138, %v137
      %vm140 = vcmask 0
      %141 = vst.msk [vmem:[#allocation4] sm:$0x1] %vm140, %v139
      // Predicated region
      $region30: #{tpu_custom_call.1} parent=28 // pred_check
        %p142 = pneg %p40
      $region31: #{tpu_custom_call.1} parent=28 // pred_check_branch
        %144 = sbr.rel (%p142) target = $region33
      $region32: #{tpu_custom_call.1} parent=28 // pred_region
        %v145 = vrcp.pop 2.0
        %v146 = vmul.f32 %v139, %v145
        %v147 = vsub.f32 1.0, %v146
        %148 = vst.msk [vmem:[#allocation10] sm:$0x1] %vm140, %v147
      $region33: #{tpu_custom_call.1} parent=28 // pred_fallthru
        _
    $region29: #{tpu_custom_call.1} parent=1 // pred_fallthru
      _
    // Predicated region
    $region34: #{tpu_custom_call.1} parent=1 // pred_check
      _
    $region35: #{tpu_custom_call.1} parent=1 // pred_check_branch
      %150 = sbr.rel (0) target = $region37
    $region36: #{tpu_custom_call.1} parent=1 // pred_region
      %s152 = ssub.s32 16, 16
      %153 = vsyncadd [#allocation7], %s152
      %s155 = sshll.u32 [#allocation10], 4
      %s156 = int_to_ptr.vmem [resolvable:$true] %s155
      %158 = dma.vmem_to_hbm [thread:$0]  %s156, 16, %s2, [#allocation7]
    $region37: #{tpu_custom_call.1} parent=1 // pred_fallthru
      _
    // Predicated region
    $region38: #{tpu_custom_call.1} parent=1 // pred_check
      _
    $region39: #{tpu_custom_call.1} parent=1 // pred_check_branch
      %160 = sbr.rel (0) target = $region41
    $region40: #{tpu_custom_call.1} parent=1 // pred_region
      %161 = dma.done [#allocation7], 16
    $region41: #{tpu_custom_call.1} parent=1 // pred_fallthru
      _
    %162 = vsyncpa [#allocation6], 1
    %163 = vsyncpa [#allocation9], 1
    %164 = vsyncpa [#allocation7], 1

</llo_original>
